<compile_context>
chip_gen: v7x
topology: tpu7x:2x2x1
jax: 0.10.0
libtpu: 0.0.40
codegen_flags: <defaults>
</compile_context>

<pallas_src>
import functools

import jax
import jax.numpy as jnp
from jax.experimental import pallas as pl
from jax.experimental.pallas import tpu as pltpu


def _axis_mask_kernel(starts_ref, ends_ref, spec_ref, out_ref, *,
                      mask_dim, n_mask, mask_value, tbc, bc_total):
    """Mask one (tbc, F, lane_tile) block.

    starts_ref / ends_ref : (n_mask, BC) int32 in SMEM (scalar-prefetched)
    spec_ref / out_ref    : (tbc, F, lane_tile) in VMEM
    mask_dim              : 1 -> frequency (sublane) dim, 2 -> time (lane) dim
    """
    if n_mask == 0:                      # unreachable (wrapper early-returns)
        out_ref[...] = spec_ref[...]
        return

    _, f, tt = spec_ref.shape
    fill = jnp.asarray(mask_value, dtype=out_ref.dtype)
    i = pl.program_id(0)

    if mask_dim == 1:
        # Frequency positions: invariant in the lane-tile index -> (F, 1) column,
        # the select below broadcasts it across the lanes.
        pos = jax.lax.broadcasted_iota(jnp.int32, (f, 1), 0)
    else:
        # Time positions of this lane tile -> (1, lane_tile) row.
        pos = (jax.lax.broadcasted_iota(jnp.int32, (1, tt), 1)
               + pl.program_id(1) * tt)

    for r in range(tbc):                 # tbc is small & static (unrolled)
        # Clamp so the (discarded) rows of a partial B*C edge tile read valid
        # SMEM scalars; their HBM stores are masked off by Pallas anyway.
        bc = jnp.minimum(i * tbc + r, bc_total - 1)
        m = None
        for k in range(n_mask):          # n_mask is tiny & static
            s = starts_ref[k, bc]
            e = ends_ref[k, bc]
            mk = (pos >= s) & (pos < e)
            m = mk if m is None else (m | mk)
        out_ref[r, :, :] = jnp.where(m, fill, spec_ref[r, :, :])


_TARGET_BLOCK_BYTES = 2 * 1024 * 1024    # ~2 MiB/block -> ~8 MiB live (4x)
_MAX_ROW_UNROLL = 64                      # bound the static per-row unroll


def _choose_tiles(bc, f, t, itemsize):
    """Pick (tbc, lane_tile) so one streaming block is ~_TARGET_BLOCK_BYTES."""
    if f * t * itemsize <= _TARGET_BLOCK_BYTES:
        lane_tile = t                                    # whole-T row fits
    else:
        lane_tile = max(128, (_TARGET_BLOCK_BYTES // (f * itemsize)) // 128 * 128)
        if lane_tile >= t:
            lane_tile = t
    row_bytes = f * lane_tile * itemsize
    tbc = int(max(1, min(bc, min(_MAX_ROW_UNROLL,
                                 _TARGET_BLOCK_BYTES // row_bytes))))
    return tbc, lane_tile


def axis_masking(specgram, starts, ends, *, axis, mask_value=0.0,
                 in_place=False, tbc=None, lane_tile=None):
    """Apply iid axis masking.

    specgram : (B, C, F, T) float array
    starts   : (n_mask, B, C) int mask-start indices along `axis`
    ends     : (n_mask, B, C) int mask-end   indices along `axis` (exclusive)
    axis     : 2 (frequency) or 3 (time)
    in_place : alias the spectrogram operand to the output (donation-friendly)
    tbc / lane_tile : optional tile-size overrides (testing / tuning)
    """
    if axis not in (2, 3):
        raise ValueError("Only Frequency and Time masking are supported")
    B, C, Fdim, T = specgram.shape
    n_mask = int(starts.shape[0])
    BC = B * C

    if n_mask == 0:                      # nothing to mask
        return specgram

    spec3 = specgram.reshape(BC, Fdim, T)
    # (n_mask, BC) int32 with the long axis last -> compact SMEM padding.
    starts2 = starts.reshape(n_mask, BC).astype(jnp.int32)
    ends2 = ends.reshape(n_mask, BC).astype(jnp.int32)

    itemsize = jnp.dtype(specgram.dtype).itemsize
    auto_tbc, auto_lane = _choose_tiles(BC, Fdim, T, itemsize)
    tbc = auto_tbc if tbc is None else int(tbc)
    lane_tile = auto_lane if lane_tile is None else int(lane_tile)
    mask_dim = 1 if axis == 2 else 2

    grid = (pl.cdiv(BC, tbc), pl.cdiv(T, lane_tile))
    block_bytes = tbc * Fdim * lane_tile * itemsize
    # in + out, double buffered, plus headroom; never beyond v7x's 64 MiB VMEM.
    vmem_limit = int(min(64 << 20, max(16 << 20, 4 * block_bytes + (4 << 20))))

    kernel = functools.partial(
        _axis_mask_kernel,
        mask_dim=mask_dim, n_mask=n_mask, mask_value=float(mask_value),
        tbc=tbc, bc_total=BC)

    spec_block = pl.BlockSpec((tbc, Fdim, lane_tile), lambda i, j, s, e: (i, 0, j))

    out3 = pl.pallas_call(
        kernel,
        out_shape=jax.ShapeDtypeStruct((BC, Fdim, T), specgram.dtype),
        grid_spec=pltpu.PrefetchScalarGridSpec(
            num_scalar_prefetch=2,
            grid=grid,
            in_specs=[spec_block],
            out_specs=spec_block,
        ),
        # Operand order is (starts, ends, spec): the spectrogram is operand 2.
        input_output_aliases={2: 0} if in_place else {},
        compiler_params=pltpu.CompilerParams(
            dimension_semantics=("parallel", "parallel"),
            vmem_limit_bytes=vmem_limit),
    )(starts2, ends2, spec3)

    return out3.reshape(B, C, Fdim, T)


def make_iid_mask_params(key, spec_shape, mask_param, axis, n_mask):
    """JAX equivalent of the torch.rand draws in mask_along_axis_iid.

    Returns (starts, ends), each (n_mask, B, C) int32, with
      start = floor(U*(size - U*mask_param)), end = start + floor(U*mask_param)
    (same distribution/semantics as torch; not bit-identical RNG stream).
    """
    B, C = spec_shape[0], spec_shape[1]
    size = spec_shape[axis]
    if n_mask == 0:
        z = jnp.zeros((0, B, C), jnp.int32)
        return z, z
    keys = jax.random.split(key, 2 * n_mask)
    starts, ends = [], []
    for k in range(n_mask):
        value = jax.random.uniform(keys[2 * k], (B, C)) * mask_param
        min_value = jax.random.uniform(keys[2 * k + 1], (B, C)) * (size - value)
        s = jnp.floor(min_value).astype(jnp.int32)
        e = s + jnp.floor(value).astype(jnp.int32)
        starts.append(s)
        ends.append(e)
    return jnp.stack(starts), jnp.stack(ends)


class AxisMasking:
    """Mirror of the PyTorch _AxisMasking module (iid, 4-D path)."""

    def __init__(self, mask_param, axis, iid_masks, n_mask=1):
        self.mask_param = mask_param
        self.axis = axis
        self.iid_masks = iid_masks
        self.n_mask = n_mask

    def __call__(self, key, specgram, mask_value=0.0):
        if self.iid_masks and specgram.ndim == 4:
            axis = self.axis + 1
            starts, ends = make_iid_mask_params(
                key, specgram.shape, self.mask_param, axis, self.n_mask)
            return axis_masking(specgram, starts, ends,
                                axis=axis, mask_value=mask_value)
        # TODO(synk): the torch module's non-iid / non-4D branch is also
        # unimplemented (it just returns the NotImplementedError class).
        raise NotImplementedError("only iid_masks with 4-D input is supported")


def _reference(specgram, starts, ends, axis, mask_value=0.0):
    """Pure-JAX mirror of mask_along_axis_iid applied n_mask times."""
    size = specgram.shape[axis]
    pos = jnp.arange(size)
    out = specgram
    for k in range(starts.shape[0]):
        s = starts[k][..., None].astype(jnp.int32)       # (B, C, 1)
        e = ends[k][..., None].astype(jnp.int32)
        m = (pos[None, None, :] >= s) & (pos[None, None, :] < e)   # (B, C, size)
        m4 = m[:, :, :, None] if axis == 2 else m[:, :, None, :]
        out = jnp.where(m4, jnp.asarray(mask_value, out.dtype), out)
    return out


if __name__ == "__main__":
    # Small deterministic problem: batch=2, channels=4, freq=16, time=16.
    B, C, Fd, T = 2, 4, 16, 16
    mask_param, n_mask = 8, 2

    key = jax.random.PRNGKey(0)
    kx, kt, kf, kb = jax.random.split(key, 4)
    spec = jax.random.normal(kx, (B, C, Fd, T), dtype=jnp.float32)

    # Time masking (module axis=2 -> tensor axis 3) via the module-style wrapper.
    masker_t = AxisMasking(mask_param=mask_param, axis=2, iid_masks=True,
                           n_mask=n_mask)
    out_t = jax.block_until_ready(masker_t(kt, spec, mask_value=0.0))
    starts_t, ends_t = make_iid_mask_params(kt, spec.shape, mask_param, 3, n_mask)
    ref_t = _reference(spec, starts_t, ends_t, axis=3, mask_value=0.0)
    assert jnp.allclose(out_t, ref_t), "time-axis masking mismatch"

    # Frequency masking (module axis=1 -> tensor axis 2).
    starts_f, ends_f = make_iid_mask_params(kf, spec.shape, mask_param, 2, n_mask)
    out_f = jax.block_until_ready(
        axis_masking(spec, starts_f, ends_f, axis=2, mask_value=0.0))
    ref_f = _reference(spec, starts_f, ends_f, axis=2, mask_value=0.0)
    assert jnp.allclose(out_f, ref_f), "frequency-axis masking mismatch"

    # Partial-tile + aliased (in-place) path: BC % tbc != 0, T % lane_tile != 0.
    B2, C2, F2, T2 = 2, 3, 16, 208            # BC=6, lane edge tile of 80
    spec2 = jax.random.normal(kb, (B2, C2, F2, T2), dtype=jnp.float32)
    starts_b, ends_b = make_iid_mask_params(kb, spec2.shape, 50, 3, n_mask)
    ref_b = _reference(spec2, starts_b, ends_b, axis=3, mask_value=-1.0)
    out_b = jax.block_until_ready(
        axis_masking(spec2, starts_b, ends_b, axis=3, mask_value=-1.0,
                     in_place=True, tbc=4, lane_tile=128))
    assert jnp.allclose(out_b, ref_b), "partial-tile / in-place masking mismatch"

    print("KERNEL_OK")
</pallas_src>

<mosaic_0001>
module attributes {stable_mosaic.version = 11 : i64} {
  func.func @_axis_mask_kernel(%arg0: i32, %arg1: i32, %arg2: memref<2x8xi32, #tpu.memory_space<smem>>, %arg3: memref<2x8xi32, #tpu.memory_space<smem>>, %arg4: memref<8x16x16xf32, #tpu.memory_space<vmem>>, %arg5: memref<8x16x16xf32, #tpu.memory_space<vmem>>) attributes {dimension_semantics = [#tpu.dimension_semantics<parallel>, #tpu.dimension_semantics<parallel>], iteration_bounds = array<i64: 1, 1>, scalar_prefetch = 2 : i64, scratch_operands = 0 : i64, tpu.core_type = #tpu.core_type<tc>, window_params = [{transform_indices = @transform_0, window_bounds = array<i64: 8, 16, 16>}, {transform_indices = @transform_1, window_bounds = array<i64: 8, 16, 16>}]} {
    %0 = tpu.iota {dimensions = array<i32: 1>} : vector<1x16xi32>
    %c16_i32 = arith.constant 16 : i32
    %1 = arith.muli %arg1, %c16_i32 : i32
    %2 = vector.broadcast %1 : i32 to vector<1x16xi32>
    %3 = arith.addi %0, %2 : vector<1x16xi32>
    %c8_i32 = arith.constant 8 : i32
    %4 = arith.muli %arg0, %c8_i32 : i32
    %c0_i32 = arith.constant 0 : i32
    %5 = arith.addi %4, %c0_i32 : i32
    %c7_i32 = arith.constant 7 : i32
    %6 = arith.minsi %5, %c7_i32 : i32
    %c0 = arith.constant 0 : index
    %7 = arith.index_cast %6 : i32 to index
    %8 = memref.load %arg2[%c0, %7] : memref<2x8xi32, #tpu.memory_space<smem>>
    %c0_0 = arith.constant 0 : index
    %9 = arith.index_cast %6 : i32 to index
    %10 = memref.load %arg3[%c0_0, %9] : memref<2x8xi32, #tpu.memory_space<smem>>
    %11 = vector.broadcast %8 : i32 to vector<1x16xi32>
    %12 = arith.cmpi sge, %3, %11 : vector<1x16xi32>
    %13 = vector.broadcast %10 : i32 to vector<1x16xi32>
    %14 = arith.cmpi slt, %3, %13 : vector<1x16xi32>
    %15 = arith.andi %12, %14 : vector<1x16xi1>
    %c1 = arith.constant 1 : index
    %16 = arith.index_cast %6 : i32 to index
    %17 = memref.load %arg2[%c1, %16] : memref<2x8xi32, #tpu.memory_space<smem>>
    %c1_1 = arith.constant 1 : index
    %18 = arith.index_cast %6 : i32 to index
    %19 = memref.load %arg3[%c1_1, %18] : memref<2x8xi32, #tpu.memory_space<smem>>
    %20 = vector.broadcast %17 : i32 to vector<1x16xi32>
    %21 = arith.cmpi sge, %3, %20 : vector<1x16xi32>
    %22 = vector.broadcast %19 : i32 to vector<1x16xi32>
    %23 = arith.cmpi slt, %3, %22 : vector<1x16xi32>
    %24 = arith.andi %21, %23 : vector<1x16xi1>
    %25 = arith.ori %15, %24 : vector<1x16xi1>
    %c0_2 = arith.constant 0 : index
    %c0_3 = arith.constant 0 : index
    %c0_4 = arith.constant 0 : index
    %26 = vector.load %arg4[%c0_2, %c0_3, %c0_4] : memref<8x16x16xf32, #tpu.memory_space<vmem>>, vector<1x16x16xf32>
    %27 = vector.shape_cast %26 : vector<1x16x16xf32> to vector<16x16xf32>
    %cst = arith.constant 0.000000e+00 : f32
    %28 = vector.shape_cast %25 : vector<1x16xi1> to vector<1x16xi1>
    %29 = vector.broadcast %28 : vector<1x16xi1> to vector<16x16xi1>
    %30 = vector.broadcast %cst : f32 to vector<16x16xf32>
    %31 = arith.select %29, %30, %27 : vector<16x16xi1>, vector<16x16xf32>
    %c0_5 = arith.constant 0 : index
    %c0_6 = arith.constant 0 : index
    %c0_7 = arith.constant 0 : index
    %32 = vector.load %arg5[%c0_5, %c0_6, %c0_7] : memref<8x16x16xf32, #tpu.memory_space<vmem>>, vector<1x16x16xf32>
    %33 = vector.shape_cast %32 : vector<1x16x16xf32> to vector<16x16xf32>
    %34 = vector.shape_cast %31 : vector<16x16xf32> to vector<1x16x16xf32>
    tpu.vector_store %arg5[%c0_5, %c0_6, %c0_7], %34 {strides = array<i32>} : memref<8x16x16xf32, #tpu.memory_space<vmem>>, vector<1x16x16xf32>,
    %c8_i32_8 = arith.constant 8 : i32
    %35 = arith.muli %arg0, %c8_i32_8 : i32
    %c1_i32 = arith.constant 1 : i32
    %36 = arith.addi %35, %c1_i32 : i32
    %c7_i32_9 = arith.constant 7 : i32
    %37 = arith.minsi %36, %c7_i32_9 : i32
    %c0_10 = arith.constant 0 : index
    %38 = arith.index_cast %37 : i32 to index
    %39 = memref.load %arg2[%c0_10, %38] : memref<2x8xi32, #tpu.memory_space<smem>>
    %c0_11 = arith.constant 0 : index
    %40 = arith.index_cast %37 : i32 to index
    %41 = memref.load %arg3[%c0_11, %40] : memref<2x8xi32, #tpu.memory_space<smem>>
    %42 = vector.broadcast %39 : i32 to vector<1x16xi32>
    %43 = arith.cmpi sge, %3, %42 : vector<1x16xi32>
    %44 = vector.broadcast %41 : i32 to vector<1x16xi32>
    %45 = arith.cmpi slt, %3, %44 : vector<1x16xi32>
    %46 = arith.andi %43, %45 : vector<1x16xi1>
    %c1_12 = arith.constant 1 : index
    %47 = arith.index_cast %37 : i32 to index
    %48 = memref.load %arg2[%c1_12, %47] : memref<2x8xi32, #tpu.memory_space<smem>>
    %c1_13 = arith.constant 1 : index
    %49 = arith.index_cast %37 : i32 to index
    %50 = memref.load %arg3[%c1_13, %49] : memref<2x8xi32, #tpu.memory_space<smem>>
    %51 = vector.broadcast %48 : i32 to vector<1x16xi32>
    %52 = arith.cmpi sge, %3, %51 : vector<1x16xi32>
    %53 = vector.broadcast %50 : i32 to vector<1x16xi32>
    %54 = arith.cmpi slt, %3, %53 : vector<1x16xi32>
    %55 = arith.andi %52, %54 : vector<1x16xi1>
    %56 = arith.ori %46, %55 : vector<1x16xi1>
    %c1_14 = arith.constant 1 : index
    %c0_15 = arith.constant 0 : index
    %c0_16 = arith.constant 0 : index
    %57 = vector.load %arg4[%c1_14, %c0_15, %c0_16] : memref<8x16x16xf32, #tpu.memory_space<vmem>>, vector<1x16x16xf32>
    %58 = vector.shape_cast %57 : vector<1x16x16xf32> to vector<16x16xf32>
    %cst_17 = arith.constant 0.000000e+00 : f32
    %59 = vector.shape_cast %56 : vector<1x16xi1> to vector<1x16xi1>
    %60 = vector.broadcast %59 : vector<1x16xi1> to vector<16x16xi1>
    %61 = vector.broadcast %cst_17 : f32 to vector<16x16xf32>
    %62 = arith.select %60, %61, %58 : vector<16x16xi1>, vector<16x16xf32>
    %c1_18 = arith.constant 1 : index
    %c0_19 = arith.constant 0 : index
    %c0_20 = arith.constant 0 : index
    %63 = vector.load %arg5[%c1_18, %c0_19, %c0_20] : memref<8x16x16xf32, #tpu.memory_space<vmem>>, vector<1x16x16xf32>
    %64 = vector.shape_cast %63 : vector<1x16x16xf32> to vector<16x16xf32>
    %65 = vector.shape_cast %62 : vector<16x16xf32> to vector<1x16x16xf32>
    tpu.vector_store %arg5[%c1_18, %c0_19, %c0_20], %65 {strides = array<i32>} : memref<8x16x16xf32, #tpu.memory_space<vmem>>, vector<1x16x16xf32>,
    %c8_i32_21 = arith.constant 8 : i32
    %66 = arith.muli %arg0, %c8_i32_21 : i32
    %c2_i32 = arith.constant 2 : i32
    %67 = arith.addi %66, %c2_i32 : i32
    %c7_i32_22 = arith.constant 7 : i32
    %68 = arith.minsi %67, %c7_i32_22 : i32
    %c0_23 = arith.constant 0 : index
    %69 = arith.index_cast %68 : i32 to index
    %70 = memref.load %arg2[%c0_23, %69] : memref<2x8xi32, #tpu.memory_space<smem>>
    %c0_24 = arith.constant 0 : index
    %71 = arith.index_cast %68 : i32 to index
    %72 = memref.load %arg3[%c0_24, %71] : memref<2x8xi32, #tpu.memory_space<smem>>
    %73 = vector.broadcast %70 : i32 to vector<1x16xi32>
    %74 = arith.cmpi sge, %3, %73 : vector<1x16xi32>
    %75 = vector.broadcast %72 : i32 to vector<1x16xi32>
    %76 = arith.cmpi slt, %3, %75 : vector<1x16xi32>
    %77 = arith.andi %74, %76 : vector<1x16xi1>
    %c1_25 = arith.constant 1 : index
    %78 = arith.index_cast %68 : i32 to index
    %79 = memref.load %arg2[%c1_25, %78] : memref<2x8xi32, #tpu.memory_space<smem>>
    %c1_26 = arith.constant 1 : index
    %80 = arith.index_cast %68 : i32 to index
    %81 = memref.load %arg3[%c1_26, %80] : memref<2x8xi32, #tpu.memory_space<smem>>
    %82 = vector.broadcast %79 : i32 to vector<1x16xi32>
    %83 = arith.cmpi sge, %3, %82 : vector<1x16xi32>
    %84 = vector.broadcast %81 : i32 to vector<1x16xi32>
    %85 = arith.cmpi slt, %3, %84 : vector<1x16xi32>
    %86 = arith.andi %83, %85 : vector<1x16xi1>
    %87 = arith.ori %77, %86 : vector<1x16xi1>
    %c2 = arith.constant 2 : index
    %c0_27 = arith.constant 0 : index
    %c0_28 = arith.constant 0 : index
    %88 = vector.load %arg4[%c2, %c0_27, %c0_28] : memref<8x16x16xf32, #tpu.memory_space<vmem>>, vector<1x16x16xf32>
    %89 = vector.shape_cast %88 : vector<1x16x16xf32> to vector<16x16xf32>
    %cst_29 = arith.constant 0.000000e+00 : f32
    %90 = vector.shape_cast %87 : vector<1x16xi1> to vector<1x16xi1>
    %91 = vector.broadcast %90 : vector<1x16xi1> to vector<16x16xi1>
    %92 = vector.broadcast %cst_29 : f32 to vector<16x16xf32>
    %93 = arith.select %91, %92, %89 : vector<16x16xi1>, vector<16x16xf32>
    %c2_30 = arith.constant 2 : index
    %c0_31 = arith.constant 0 : index
    %c0_32 = arith.constant 0 : index
    %94 = vector.load %arg5[%c2_30, %c0_31, %c0_32] : memref<8x16x16xf32, #tpu.memory_space<vmem>>, vector<1x16x16xf32>
    %95 = vector.shape_cast %94 : vector<1x16x16xf32> to vector<16x16xf32>
    %96 = vector.shape_cast %93 : vector<16x16xf32> to vector<1x16x16xf32>
    tpu.vector_store %arg5[%c2_30, %c0_31, %c0_32], %96 {strides = array<i32>} : memref<8x16x16xf32, #tpu.memory_space<vmem>>, vector<1x16x16xf32>,
    %c8_i32_33 = arith.constant 8 : i32
    %97 = arith.muli %arg0, %c8_i32_33 : i32
    %c3_i32 = arith.constant 3 : i32
    %98 = arith.addi %97, %c3_i32 : i32
    %c7_i32_34 = arith.constant 7 : i32
    %99 = arith.minsi %98, %c7_i32_34 : i32
    %c0_35 = arith.constant 0 : index
    %100 = arith.index_cast %99 : i32 to index
    %101 = memref.load %arg2[%c0_35, %100] : memref<2x8xi32, #tpu.memory_space<smem>>
    %c0_36 = arith.constant 0 : index
    %102 = arith.index_cast %99 : i32 to index
    %103 = memref.load %arg3[%c0_36, %102] : memref<2x8xi32, #tpu.memory_space<smem>>
    %104 = vector.broadcast %101 : i32 to vector<1x16xi32>
    %105 = arith.cmpi sge, %3, %104 : vector<1x16xi32>
    %106 = vector.broadcast %103 : i32 to vector<1x16xi32>
    %107 = arith.cmpi slt, %3, %106 : vector<1x16xi32>
    %108 = arith.andi %105, %107 : vector<1x16xi1>
    %c1_37 = arith.constant 1 : index
    %109 = arith.index_cast %99 : i32 to index
    %110 = memref.load %arg2[%c1_37, %109] : memref<2x8xi32, #tpu.memory_space<smem>>
    %c1_38 = arith.constant 1 : index
    %111 = arith.index_cast %99 : i32 to index
    %112 = memref.load %arg3[%c1_38, %111] : memref<2x8xi32, #tpu.memory_space<smem>>
    %113 = vector.broadcast %110 : i32 to vector<1x16xi32>
    %114 = arith.cmpi sge, %3, %113 : vector<1x16xi32>
    %115 = vector.broadcast %112 : i32 to vector<1x16xi32>
    %116 = arith.cmpi slt, %3, %115 : vector<1x16xi32>
    %117 = arith.andi %114, %116 : vector<1x16xi1>
    %118 = arith.ori %108, %117 : vector<1x16xi1>
    %c3 = arith.constant 3 : index
    %c0_39 = arith.constant 0 : index
    %c0_40 = arith.constant 0 : index
    %119 = vector.load %arg4[%c3, %c0_39, %c0_40] : memref<8x16x16xf32, #tpu.memory_space<vmem>>, vector<1x16x16xf32>
    %120 = vector.shape_cast %119 : vector<1x16x16xf32> to vector<16x16xf32>
    %cst_41 = arith.constant 0.000000e+00 : f32
    %121 = vector.shape_cast %118 : vector<1x16xi1> to vector<1x16xi1>
    %122 = vector.broadcast %121 : vector<1x16xi1> to vector<16x16xi1>
    %123 = vector.broadcast %cst_41 : f32 to vector<16x16xf32>
    %124 = arith.select %122, %123, %120 : vector<16x16xi1>, vector<16x16xf32>
    %c3_42 = arith.constant 3 : index
    %c0_43 = arith.constant 0 : index
    %c0_44 = arith.constant 0 : index
    %125 = vector.load %arg5[%c3_42, %c0_43, %c0_44] : memref<8x16x16xf32, #tpu.memory_space<vmem>>, vector<1x16x16xf32>
    %126 = vector.shape_cast %125 : vector<1x16x16xf32> to vector<16x16xf32>
    %127 = vector.shape_cast %124 : vector<16x16xf32> to vector<1x16x16xf32>
    tpu.vector_store %arg5[%c3_42, %c0_43, %c0_44], %127 {strides = array<i32>} : memref<8x16x16xf32, #tpu.memory_space<vmem>>, vector<1x16x16xf32>,
    %c8_i32_45 = arith.constant 8 : i32
    %128 = arith.muli %arg0, %c8_i32_45 : i32
    %c4_i32 = arith.constant 4 : i32
    %129 = arith.addi %128, %c4_i32 : i32
    %c7_i32_46 = arith.constant 7 : i32
    %130 = arith.minsi %129, %c7_i32_46 : i32
    %c0_47 = arith.constant 0 : index
    %131 = arith.index_cast %130 : i32 to index
    %132 = memref.load %arg2[%c0_47, %131] : memref<2x8xi32, #tpu.memory_space<smem>>
    %c0_48 = arith.constant 0 : index
    %133 = arith.index_cast %130 : i32 to index
    %134 = memref.load %arg3[%c0_48, %133] : memref<2x8xi32, #tpu.memory_space<smem>>
    %135 = vector.broadcast %132 : i32 to vector<1x16xi32>
    %136 = arith.cmpi sge, %3, %135 : vector<1x16xi32>
    %137 = vector.broadcast %134 : i32 to vector<1x16xi32>
    %138 = arith.cmpi slt, %3, %137 : vector<1x16xi32>
    %139 = arith.andi %136, %138 : vector<1x16xi1>
    %c1_49 = arith.constant 1 : index
    %140 = arith.index_cast %130 : i32 to index
    %141 = memref.load %arg2[%c1_49, %140] : memref<2x8xi32, #tpu.memory_space<smem>>
    %c1_50 = arith.constant 1 : index
    %142 = arith.index_cast %130 : i32 to index
    %143 = memref.load %arg3[%c1_50, %142] : memref<2x8xi32, #tpu.memory_space<smem>>
    %144 = vector.broadcast %141 : i32 to vector<1x16xi32>
    %145 = arith.cmpi sge, %3, %144 : vector<1x16xi32>
    %146 = vector.broadcast %143 : i32 to vector<1x16xi32>
    %147 = arith.cmpi slt, %3, %146 : vector<1x16xi32>
    %148 = arith.andi %145, %147 : vector<1x16xi1>
    %149 = arith.ori %139, %148 : vector<1x16xi1>
    %c4 = arith.constant 4 : index
    %c0_51 = arith.constant 0 : index
    %c0_52 = arith.constant 0 : index
    %150 = vector.load %arg4[%c4, %c0_51, %c0_52] : memref<8x16x16xf32, #tpu.memory_space<vmem>>, vector<1x16x16xf32>
    %151 = vector.shape_cast %150 : vector<1x16x16xf32> to vector<16x16xf32>
    %cst_53 = arith.constant 0.000000e+00 : f32
    %152 = vector.shape_cast %149 : vector<1x16xi1> to vector<1x16xi1>
    %153 = vector.broadcast %152 : vector<1x16xi1> to vector<16x16xi1>
    %154 = vector.broadcast %cst_53 : f32 to vector<16x16xf32>
    %155 = arith.select %153, %154, %151 : vector<16x16xi1>, vector<16x16xf32>
    %c4_54 = arith.constant 4 : index
    %c0_55 = arith.constant 0 : index
    %c0_56 = arith.constant 0 : index
    %156 = vector.load %arg5[%c4_54, %c0_55, %c0_56] : memref<8x16x16xf32, #tpu.memory_space<vmem>>, vector<1x16x16xf32>
    %157 = vector.shape_cast %156 : vector<1x16x16xf32> to vector<16x16xf32>
    %158 = vector.shape_cast %155 : vector<16x16xf32> to vector<1x16x16xf32>
    tpu.vector_store %arg5[%c4_54, %c0_55, %c0_56], %158 {strides = array<i32>} : memref<8x16x16xf32, #tpu.memory_space<vmem>>, vector<1x16x16xf32>,
    %c8_i32_57 = arith.constant 8 : i32
    %159 = arith.muli %arg0, %c8_i32_57 : i32
    %c5_i32 = arith.constant 5 : i32
    %160 = arith.addi %159, %c5_i32 : i32
    %c7_i32_58 = arith.constant 7 : i32
    %161 = arith.minsi %160, %c7_i32_58 : i32
    %c0_59 = arith.constant 0 : index
    %162 = arith.index_cast %161 : i32 to index
    %163 = memref.load %arg2[%c0_59, %162] : memref<2x8xi32, #tpu.memory_space<smem>>
    %c0_60 = arith.constant 0 : index
    %164 = arith.index_cast %161 : i32 to index
    %165 = memref.load %arg3[%c0_60, %164] : memref<2x8xi32, #tpu.memory_space<smem>>
    %166 = vector.broadcast %163 : i32 to vector<1x16xi32>
    %167 = arith.cmpi sge, %3, %166 : vector<1x16xi32>
    %168 = vector.broadcast %165 : i32 to vector<1x16xi32>
    %169 = arith.cmpi slt, %3, %168 : vector<1x16xi32>
    %170 = arith.andi %167, %169 : vector<1x16xi1>
    %c1_61 = arith.constant 1 : index
    %171 = arith.index_cast %161 : i32 to index
    %172 = memref.load %arg2[%c1_61, %171] : memref<2x8xi32, #tpu.memory_space<smem>>
    %c1_62 = arith.constant 1 : index
    %173 = arith.index_cast %161 : i32 to index
    %174 = memref.load %arg3[%c1_62, %173] : memref<2x8xi32, #tpu.memory_space<smem>>
    %175 = vector.broadcast %172 : i32 to vector<1x16xi32>
    %176 = arith.cmpi sge, %3, %175 : vector<1x16xi32>
    %177 = vector.broadcast %174 : i32 to vector<1x16xi32>
    %178 = arith.cmpi slt, %3, %177 : vector<1x16xi32>
    %179 = arith.andi %176, %178 : vector<1x16xi1>
    %180 = arith.ori %170, %179 : vector<1x16xi1>
    %c5 = arith.constant 5 : index
    %c0_63 = arith.constant 0 : index
    %c0_64 = arith.constant 0 : index
    %181 = vector.load %arg4[%c5, %c0_63, %c0_64] : memref<8x16x16xf32, #tpu.memory_space<vmem>>, vector<1x16x16xf32>
    %182 = vector.shape_cast %181 : vector<1x16x16xf32> to vector<16x16xf32>
    %cst_65 = arith.constant 0.000000e+00 : f32
    %183 = vector.shape_cast %180 : vector<1x16xi1> to vector<1x16xi1>
    %184 = vector.broadcast %183 : vector<1x16xi1> to vector<16x16xi1>
    %185 = vector.broadcast %cst_65 : f32 to vector<16x16xf32>
    %186 = arith.select %184, %185, %182 : vector<16x16xi1>, vector<16x16xf32>
    %c5_66 = arith.constant 5 : index
    %c0_67 = arith.constant 0 : index
    %c0_68 = arith.constant 0 : index
    %187 = vector.load %arg5[%c5_66, %c0_67, %c0_68] : memref<8x16x16xf32, #tpu.memory_space<vmem>>, vector<1x16x16xf32>
    %188 = vector.shape_cast %187 : vector<1x16x16xf32> to vector<16x16xf32>
    %189 = vector.shape_cast %186 : vector<16x16xf32> to vector<1x16x16xf32>
    tpu.vector_store %arg5[%c5_66, %c0_67, %c0_68], %189 {strides = array<i32>} : memref<8x16x16xf32, #tpu.memory_space<vmem>>, vector<1x16x16xf32>,
    %c8_i32_69 = arith.constant 8 : i32
    %190 = arith.muli %arg0, %c8_i32_69 : i32
    %c6_i32 = arith.constant 6 : i32
    %191 = arith.addi %190, %c6_i32 : i32
    %c7_i32_70 = arith.constant 7 : i32
    %192 = arith.minsi %191, %c7_i32_70 : i32
    %c0_71 = arith.constant 0 : index
    %193 = arith.index_cast %192 : i32 to index
    %194 = memref.load %arg2[%c0_71, %193] : memref<2x8xi32, #tpu.memory_space<smem>>
    %c0_72 = arith.constant 0 : index
    %195 = arith.index_cast %192 : i32 to index
    %196 = memref.load %arg3[%c0_72, %195] : memref<2x8xi32, #tpu.memory_space<smem>>
    %197 = vector.broadcast %194 : i32 to vector<1x16xi32>
    %198 = arith.cmpi sge, %3, %197 : vector<1x16xi32>
    %199 = vector.broadcast %196 : i32 to vector<1x16xi32>
    %200 = arith.cmpi slt, %3, %199 : vector<1x16xi32>
    %201 = arith.andi %198, %200 : vector<1x16xi1>
    %c1_73 = arith.constant 1 : index
    %202 = arith.index_cast %192 : i32 to index
    %203 = memref.load %arg2[%c1_73, %202] : memref<2x8xi32, #tpu.memory_space<smem>>
    %c1_74 = arith.constant 1 : index
    %204 = arith.index_cast %192 : i32 to index
    %205 = memref.load %arg3[%c1_74, %204] : memref<2x8xi32, #tpu.memory_space<smem>>
    %206 = vector.broadcast %203 : i32 to vector<1x16xi32>
    %207 = arith.cmpi sge, %3, %206 : vector<1x16xi32>
    %208 = vector.broadcast %205 : i32 to vector<1x16xi32>
    %209 = arith.cmpi slt, %3, %208 : vector<1x16xi32>
    %210 = arith.andi %207, %209 : vector<1x16xi1>
    %211 = arith.ori %201, %210 : vector<1x16xi1>
    %c6 = arith.constant 6 : index
    %c0_75 = arith.constant 0 : index
    %c0_76 = arith.constant 0 : index
    %212 = vector.load %arg4[%c6, %c0_75, %c0_76] : memref<8x16x16xf32, #tpu.memory_space<vmem>>, vector<1x16x16xf32>
    %213 = vector.shape_cast %212 : vector<1x16x16xf32> to vector<16x16xf32>
    %cst_77 = arith.constant 0.000000e+00 : f32
    %214 = vector.shape_cast %211 : vector<1x16xi1> to vector<1x16xi1>
    %215 = vector.broadcast %214 : vector<1x16xi1> to vector<16x16xi1>
    %216 = vector.broadcast %cst_77 : f32 to vector<16x16xf32>
    %217 = arith.select %215, %216, %213 : vector<16x16xi1>, vector<16x16xf32>
    %c6_78 = arith.constant 6 : index
    %c0_79 = arith.constant 0 : index
    %c0_80 = arith.constant 0 : index
    %218 = vector.load %arg5[%c6_78, %c0_79, %c0_80] : memref<8x16x16xf32, #tpu.memory_space<vmem>>, vector<1x16x16xf32>
    %219 = vector.shape_cast %218 : vector<1x16x16xf32> to vector<16x16xf32>
    %220 = vector.shape_cast %217 : vector<16x16xf32> to vector<1x16x16xf32>
    tpu.vector_store %arg5[%c6_78, %c0_79, %c0_80], %220 {strides = array<i32>} : memref<8x16x16xf32, #tpu.memory_space<vmem>>, vector<1x16x16xf32>,
    %c8_i32_81 = arith.constant 8 : i32
    %221 = arith.muli %arg0, %c8_i32_81 : i32
    %c7_i32_82 = arith.constant 7 : i32
    %222 = arith.addi %221, %c7_i32_82 : i32
    %c7_i32_83 = arith.constant 7 : i32
    %223 = arith.minsi %222, %c7_i32_83 : i32
    %c0_84 = arith.constant 0 : index
    %224 = arith.index_cast %223 : i32 to index
    %225 = memref.load %arg2[%c0_84, %224] : memref<2x8xi32, #tpu.memory_space<smem>>
    %c0_85 = arith.constant 0 : index
    %226 = arith.index_cast %223 : i32 to index
    %227 = memref.load %arg3[%c0_85, %226] : memref<2x8xi32, #tpu.memory_space<smem>>
    %228 = vector.broadcast %225 : i32 to vector<1x16xi32>
    %229 = arith.cmpi sge, %3, %228 : vector<1x16xi32>
    %230 = vector.broadcast %227 : i32 to vector<1x16xi32>
    %231 = arith.cmpi slt, %3, %230 : vector<1x16xi32>
    %232 = arith.andi %229, %231 : vector<1x16xi1>
    %c1_86 = arith.constant 1 : index
    %233 = arith.index_cast %223 : i32 to index
    %234 = memref.load %arg2[%c1_86, %233] : memref<2x8xi32, #tpu.memory_space<smem>>
    %c1_87 = arith.constant 1 : index
    %235 = arith.index_cast %223 : i32 to index
    %236 = memref.load %arg3[%c1_87, %235] : memref<2x8xi32, #tpu.memory_space<smem>>
    %237 = vector.broadcast %234 : i32 to vector<1x16xi32>
    %238 = arith.cmpi sge, %3, %237 : vector<1x16xi32>
    %239 = vector.broadcast %236 : i32 to vector<1x16xi32>
    %240 = arith.cmpi slt, %3, %239 : vector<1x16xi32>
    %241 = arith.andi %238, %240 : vector<1x16xi1>
    %242 = arith.ori %232, %241 : vector<1x16xi1>
    %c7 = arith.constant 7 : index
    %c0_88 = arith.constant 0 : index
    %c0_89 = arith.constant 0 : index
    %243 = vector.load %arg4[%c7, %c0_88, %c0_89] : memref<8x16x16xf32, #tpu.memory_space<vmem>>, vector<1x16x16xf32>
    %244 = vector.shape_cast %243 : vector<1x16x16xf32> to vector<16x16xf32>
    %cst_90 = arith.constant 0.000000e+00 : f32
    %245 = vector.shape_cast %242 : vector<1x16xi1> to vector<1x16xi1>
    %246 = vector.broadcast %245 : vector<1x16xi1> to vector<16x16xi1>
    %247 = vector.broadcast %cst_90 : f32 to vector<16x16xf32>
    %248 = arith.select %246, %247, %244 : vector<16x16xi1>, vector<16x16xf32>
    %c7_91 = arith.constant 7 : index
    %c0_92 = arith.constant 0 : index
    %c0_93 = arith.constant 0 : index
    %249 = vector.load %arg5[%c7_91, %c0_92, %c0_93] : memref<8x16x16xf32, #tpu.memory_space<vmem>>, vector<1x16x16xf32>
    %250 = vector.shape_cast %249 : vector<1x16x16xf32> to vector<16x16xf32>
    %251 = vector.shape_cast %248 : vector<16x16xf32> to vector<1x16x16xf32>
    tpu.vector_store %arg5[%c7_91, %c0_92, %c0_93], %251 {strides = array<i32>} : memref<8x16x16xf32, #tpu.memory_space<vmem>>, vector<1x16x16xf32>,
    return
  }
  func.func @transform_0(%arg0: i32, %arg1: i32, %arg2: memref<2x8xi32, #tpu.memory_space<smem>>, %arg3: memref<2x8xi32, #tpu.memory_space<smem>>) -> (i32, i32, i32) {
    %c0_i32 = arith.constant 0 : i32
    %c0_i32_0 = arith.constant 0 : i32
    return %arg0, %c0_i32, %arg1 : i32, i32, i32
  }
  func.func @transform_1(%arg0: i32, %arg1: i32, %arg2: memref<2x8xi32, #tpu.memory_space<smem>>, %arg3: memref<2x8xi32, #tpu.memory_space<smem>>) -> (i32, i32, i32) {
    %c0_i32 = arith.constant 0 : i32
    %c0_i32_0 = arith.constant 0 : i32
    return %arg0, %c0_i32, %arg1 : i32, i32, i32
  }
}

</mosaic_0001>

<llo_original>
// kernel: tpu_custom_call.1
$region0: #{tpu_custom_call.1}
  #allocation0 [shape = 'u32[]', space=smem, size = 0x4, offset = 0x4, fixed_abs, tag = 'smem constant byte address 0x4 - core index']
  #allocation1 [shape = 'u32[144,128]{1,0:T(1,128)}', space=vmem, size = 0x12000, scoped, tag = 'internal scratch']
  #allocation2 [shape = 's32[1]{0}', space=sflag, size = 0x4, scoped, tag = 'scoped memory for tpu_custom_call.1']
  #allocation3 [shape = 'u8[1024]{0}', space=smem, size = 0x400, scoped, tag = 'prefetched SMEM operand 0']
  #allocation4 [shape = 'u8[1024]{0}', space=smem, size = 0x400, scoped, tag = 'prefetched SMEM operand 1']
  %s0 = inlined_call_operand.hbm [shape: s32[2,8], index: 0, kind: input, shape index: {}]
  %s1 = inlined_call_operand.vmem [shape: s32[2,8], index: 1, kind: input, shape index: {}]
  %s2 = inlined_call_operand.hbm [shape: f32[8,16,16], index: 2, kind: input, shape index: {}]
  %s3 = inlined_call_operand.hbm [shape: f32[8,16,16], index: 3, kind: output, shape index: {}]
  %s4 = sld [smem:[#allocation0]]
  $region18: #{tpu_custom_call.1} parent=0
    _
  %s6 = ssub.s32 1, %s4
  %s7 = scalar_select 0, %s6, %s4
  %9 = dma.hbm_to_smem %s0, 32, [#allocation3], [#allocation2]
  %s10 = sshll.u32 %s1, 4
  %s11 = int_to_ptr.vmem [resolvable:$true] %s10
  %13 = dma.vmem_to_smem %s11, 32, [#allocation4], [#allocation2]
  %14 = dma.done [#allocation2], 64
  %15 = sfence
  $region1: #{tpu_custom_call.1} parent=0
    #allocation5 [shape = 'u8[65536]{0}', space=vmem, size = 0x10000, scoped, tag = 'input window, operand 2, single buffered']
    #allocation6 [shape = 's32[1]{0}', space=sflag, size = 0x4, scoped, tag = 'scoped memory for tpu_custom_call.1']
    #allocation7 [shape = 's32[1]{0}', space=sflag, size = 0x4, scoped, tag = 'scoped memory for tpu_custom_call.1']
    #allocation8 [shape = 'u8[65536]{0}', space=vmem, size = 0x10000, scoped, tag = 'output window, operand 0, single buffered']
    %16 = vsyncpa [#allocation6], 0
    %17 = vsyncpa [#allocation7], 0
    // Predicated region
    $region2: #{tpu_custom_call.1} parent=1 // pred_check
      _
    $region3: #{tpu_custom_call.1} parent=1 // pred_check_branch
      %19 = sbr.rel (0) target = $region5
    $region4: #{tpu_custom_call.1} parent=1 // pred_region
      %s21 = ssub.s32 2048, 2048
      %22 = vsyncadd [#allocation6], %s21
      %s23 = sshll.u32 [#allocation5], 4
      %s24 = int_to_ptr.vmem [resolvable:$true] %s23
      %29 = dma.hbm_to_vmem [thread:$0]  %s2, 2048, %s24, [#allocation6], 128, 128, 8
    $region5: #{tpu_custom_call.1} parent=1 // pred_fallthru
      _
    // Predicated region
    $region6: #{tpu_custom_call.1} parent=1 // pred_check
      _
    $region7: #{tpu_custom_call.1} parent=1 // pred_check_branch
      %31 = sbr.rel (0) target = $region9
    $region8: #{tpu_custom_call.1} parent=1 // pred_region
      %32 = dma.done [#allocation6], 2048
    $region9: #{tpu_custom_call.1} parent=1 // pred_fallthru
      _
    %v33 = vlaneseq
    %v34 = vand.u32 %v33, 127
    %s35 = smul.u32 0, 16
    %v36 = vstv %s35
    %v37 = vadd.s32 %v34, %v36
    %s38 = smul.u32 0, 8
    %p39 = scmp.lt.s32.totalorder %s38, 7
    %s40 = scalar_select %p39, %s38, 7
    %s41 = sld [smem:[#allocation3 + %s40]]
    %s42 = sld [smem:[#allocation4 + %s40]]
    %v43 = vstv %s41
    %vm44 = vcmp.ge.s32.totalorder %v37, %v43
    %v45 = vstv %s42
    %vm46 = vcmp.lt.s32.totalorder %v37, %v45
    %vm47 = vmand %vm44, %vm46
    %s48 = sshra.s32 %s40, 7
    %s49 = sand.u32 %s40, 127
    %s50 = sadd.s32 %s48, 1
    %s51 = smul.u32 %s50, 128
    %s52 = sshra.s32 %s40, 7
    %s53 = sand.u32 %s40, 127
    %s54 = sadd.s32 %s51, %s53
    %s55 = sld [smem:[#allocation3 + %s54]]
    %s56 = sld [smem:[#allocation4 + %s54]]
    %v57 = vstv %s55
    %vm58 = vcmp.ge.s32.totalorder %v37, %v57
    %v59 = vstv %s56
    %vm60 = vcmp.lt.s32.totalorder %v37, %v59
    %vm61 = vmand %vm58, %vm60
    %vm62 = vmor %vm47, %vm61
    %v63 = vld [vmem:[#allocation5] sm:$0xff]
    %v64 = vld [vmem:[#allocation5 + $0x8] sm:$0xff]
    %v65 = vsel %vm62, 1, 0
    %vm66 = vcmp.eq.s32.totalorder %v65, 1
    %v67 = vsel %vm66, 0.0, %v63
    %v68 = vsel %vm66, 0.0, %v64
    %vm69 = vcmask 130048
    %70 = vst.msk [vmem:[#allocation8] sm:$0xff] %vm69, %v67
    %71 = vst.msk [vmem:[#allocation8 + $0x8] sm:$0xff] %vm69, %v68
    %s72 = sadd.s32 %s38, 1
    %p73 = scmp.lt.s32.totalorder %s72, 7
    %s74 = scalar_select %p73, %s72, 7
    %s75 = sld [smem:[#allocation3 + %s74]]
    %s76 = sld [smem:[#allocation4 + %s74]]
    %v77 = vstv %s75
    %vm78 = vcmp.ge.s32.totalorder %v37, %v77
    %v79 = vstv %s76
    %vm80 = vcmp.lt.s32.totalorder %v37, %v79
    %vm81 = vmand %vm78, %vm80
    %s82 = sshra.s32 %s74, 7
    %s83 = sand.u32 %s74, 127
    %s84 = sadd.s32 %s82, 1
    %s85 = smul.u32 %s84, 128
    %s86 = sshra.s32 %s74, 7
    %s87 = sand.u32 %s74, 127
    %s88 = sadd.s32 %s85, %s87
    %s89 = sld [smem:[#allocation3 + %s88]]
    %s90 = sld [smem:[#allocation4 + %s88]]
    %v91 = vstv %s89
    %vm92 = vcmp.ge.s32.totalorder %v37, %v91
    %v93 = vstv %s90
    %vm94 = vcmp.lt.s32.totalorder %v37, %v93
    %vm95 = vmand %vm92, %vm94
    %vm96 = vmor %vm81, %vm95
    %s97 = scalar_lea.vmem [#allocation5], 16
    %v98 = vld [vmem:[%s97] sm:$0xff]
    %v99 = vld [vmem:[%s97 + $0x8] sm:$0xff]
    %v100 = vsel %vm96, 1, 0
    %vm101 = vcmp.eq.s32.totalorder %v100, 1
    %v102 = vsel %vm101, 0.0, %v98
    %v103 = vsel %vm101, 0.0, %v99
    %s104 = scalar_lea.vmem [#allocation8], 16
    %105 = vst.msk [vmem:[%s104] sm:$0xff] %vm69, %v102
    %106 = vst.msk [vmem:[%s104 + $0x8] sm:$0xff] %vm69, %v103
    %s107 = sadd.s32 %s38, 2
    %p108 = scmp.lt.s32.totalorder %s107, 7
    %s109 = scalar_select %p108, %s107, 7
    %s110 = sld [smem:[#allocation3 + %s109]]
    %s111 = sld [smem:[#allocation4 + %s109]]
    %v112 = vstv %s110
    %vm113 = vcmp.ge.s32.totalorder %v37, %v112
    %v114 = vstv %s111
    %vm115 = vcmp.lt.s32.totalorder %v37, %v114
    %vm116 = vmand %vm113, %vm115
    %s117 = sshra.s32 %s109, 7
    %s118 = sand.u32 %s109, 127
    %s119 = sadd.s32 %s117, 1
    %s120 = smul.u32 %s119, 128
    %s121 = sshra.s32 %s109, 7
    %s122 = sand.u32 %s109, 127
    %s123 = sadd.s32 %s120, %s122
    %s124 = sld [smem:[#allocation3 + %s123]]
    %s125 = sld [smem:[#allocation4 + %s123]]
    %v126 = vstv %s124
    %vm127 = vcmp.ge.s32.totalorder %v37, %v126
    %v128 = vstv %s125
    %vm129 = vcmp.lt.s32.totalorder %v37, %v128
    %vm130 = vmand %vm127, %vm129
    %vm131 = vmor %vm116, %vm130
    %s132 = scalar_lea.vmem [#allocation5], 32
    %v133 = vld [vmem:[%s132] sm:$0xff]
    %v134 = vld [vmem:[%s132 + $0x8] sm:$0xff]
    %v135 = vsel %vm131, 1, 0
    %vm136 = vcmp.eq.s32.totalorder %v135, 1
    %v137 = vsel %vm136, 0.0, %v133
    %v138 = vsel %vm136, 0.0, %v134
    %s139 = scalar_lea.vmem [#allocation8], 32
    %140 = vst.msk [vmem:[%s139] sm:$0xff] %vm69, %v137
    %141 = vst.msk [vmem:[%s139 + $0x8] sm:$0xff] %vm69, %v138
    %s142 = sadd.s32 %s38, 3
    %p143 = scmp.lt.s32.totalorder %s142, 7
    %s144 = scalar_select %p143, %s142, 7
    %s145 = sld [smem:[#allocation3 + %s144]]
    %s146 = sld [smem:[#allocation4 + %s144]]
    %v147 = vstv %s145
    %vm148 = vcmp.ge.s32.totalorder %v37, %v147
    %v149 = vstv %s146
    %vm150 = vcmp.lt.s32.totalorder %v37, %v149
    %vm151 = vmand %vm148, %vm150
    %s152 = sshra.s32 %s144, 7
    %s153 = sand.u32 %s144, 127
    %s154 = sadd.s32 %s152, 1
    %s155 = smul.u32 %s154, 128
    %s156 = sshra.s32 %s144, 7
    %s157 = sand.u32 %s144, 127
    %s158 = sadd.s32 %s155, %s157
    %s159 = sld [smem:[#allocation3 + %s158]]
    %s160 = sld [smem:[#allocation4 + %s158]]
    %v161 = vstv %s159
    %vm162 = vcmp.ge.s32.totalorder %v37, %v161
    %v163 = vstv %s160
    %vm164 = vcmp.lt.s32.totalorder %v37, %v163
    %vm165 = vmand %vm162, %vm164
    %vm166 = vmor %vm151, %vm165
    %s167 = scalar_lea.vmem [#allocation5], 48
    %v168 = vld [vmem:[%s167] sm:$0xff]
    %v169 = vld [vmem:[%s167 + $0x8] sm:$0xff]
    %v170 = vsel %vm166, 1, 0
    %vm171 = vcmp.eq.s32.totalorder %v170, 1
    %v172 = vsel %vm171, 0.0, %v168
    %v173 = vsel %vm171, 0.0, %v169
    %s174 = scalar_lea.vmem [#allocation8], 48
    %175 = vst.msk [vmem:[%s174] sm:$0xff] %vm69, %v172
    %176 = vst.msk [vmem:[%s174 + $0x8] sm:$0xff] %vm69, %v173
    %s177 = sadd.s32 %s38, 4
    %p178 = scmp.lt.s32.totalorder %s177, 7
    %s179 = scalar_select %p178, %s177, 7
    %s180 = sld [smem:[#allocation3 + %s179]]
    %s181 = sld [smem:[#allocation4 + %s179]]
    %v182 = vstv %s180
    %vm183 = vcmp.ge.s32.totalorder %v37, %v182
    %v184 = vstv %s181
    %vm185 = vcmp.lt.s32.totalorder %v37, %v184
    %vm186 = vmand %vm183, %vm185
    %s187 = sshra.s32 %s179, 7
    %s188 = sand.u32 %s179, 127
    %s189 = sadd.s32 %s187, 1
    %s190 = smul.u32 %s189, 128
    %s191 = sshra.s32 %s179, 7
    %s192 = sand.u32 %s179, 127
    %s193 = sadd.s32 %s190, %s192
    %s194 = sld [smem:[#allocation3 + %s193]]
    %s195 = sld [smem:[#allocation4 + %s193]]
    %v196 = vstv %s194
    %vm197 = vcmp.ge.s32.totalorder %v37, %v196
    %v198 = vstv %s195
    %vm199 = vcmp.lt.s32.totalorder %v37, %v198
    %vm200 = vmand %vm197, %vm199
    %vm201 = vmor %vm186, %vm200
    %s202 = scalar_lea.vmem [#allocation5], 64
    %v203 = vld [vmem:[%s202] sm:$0xff]
    %v204 = vld [vmem:[%s202 + $0x8] sm:$0xff]
    %v205 = vsel %vm201, 1, 0
    %vm206 = vcmp.eq.s32.totalorder %v205, 1
    %v207 = vsel %vm206, 0.0, %v203
    %v208 = vsel %vm206, 0.0, %v204
    %s209 = scalar_lea.vmem [#allocation8], 64
    %210 = vst.msk [vmem:[%s209] sm:$0xff] %vm69, %v207
    %211 = vst.msk [vmem:[%s209 + $0x8] sm:$0xff] %vm69, %v208
    %s212 = sadd.s32 %s38, 5
    %p213 = scmp.lt.s32.totalorder %s212, 7
    %s214 = scalar_select %p213, %s212, 7
    %s215 = sld [smem:[#allocation3 + %s214]]
    %s216 = sld [smem:[#allocation4 + %s214]]
    %v217 = vstv %s215
    %vm218 = vcmp.ge.s32.totalorder %v37, %v217
    %v219 = vstv %s216
    %vm220 = vcmp.lt.s32.totalorder %v37, %v219
    %vm221 = vmand %vm218, %vm220
    %s222 = sshra.s32 %s214, 7
    %s223 = sand.u32 %s214, 127
    %s224 = sadd.s32 %s222, 1
    %s225 = smul.u32 %s224, 128
    %s226 = sshra.s32 %s214, 7
    %s227 = sand.u32 %s214, 127
    %s228 = sadd.s32 %s225, %s227
    %s229 = sld [smem:[#allocation3 + %s228]]
    %s230 = sld [smem:[#allocation4 + %s228]]
    %v231 = vstv %s229
    %vm232 = vcmp.ge.s32.totalorder %v37, %v231
    %v233 = vstv %s230
    %vm234 = vcmp.lt.s32.totalorder %v37, %v233
    %vm235 = vmand %vm232, %vm234
    %vm236 = vmor %vm221, %vm235
    %s237 = scalar_lea.vmem [#allocation5], 80
    %v238 = vld [vmem:[%s237] sm:$0xff]
    %v239 = vld [vmem:[%s237 + $0x8] sm:$0xff]
    %v240 = vsel %vm236, 1, 0
    %vm241 = vcmp.eq.s32.totalorder %v240, 1
    %v242 = vsel %vm241, 0.0, %v238
    %v243 = vsel %vm241, 0.0, %v239
    %s244 = scalar_lea.vmem [#allocation8], 80
    %245 = vst.msk [vmem:[%s244] sm:$0xff] %vm69, %v242
    %246 = vst.msk [vmem:[%s244 + $0x8] sm:$0xff] %vm69, %v243
    %s247 = sadd.s32 %s38, 6
    %p248 = scmp.lt.s32.totalorder %s247, 7
    %s249 = scalar_select %p248, %s247, 7
    %s250 = sld [smem:[#allocation3 + %s249]]
    %s251 = sld [smem:[#allocation4 + %s249]]
    %v252 = vstv %s250
    %vm253 = vcmp.ge.s32.totalorder %v37, %v252
    %v254 = vstv %s251
    %vm255 = vcmp.lt.s32.totalorder %v37, %v254
    %vm256 = vmand %vm253, %vm255
    %s257 = sshra.s32 %s249, 7
    %s258 = sand.u32 %s249, 127
    %s259 = sadd.s32 %s257, 1
    %s260 = smul.u32 %s259, 128
    %s261 = sshra.s32 %s249, 7
    %s262 = sand.u32 %s249, 127
    %s263 = sadd.s32 %s260, %s262
    %s264 = sld [smem:[#allocation3 + %s263]]
    %s265 = sld [smem:[#allocation4 + %s263]]
    %v266 = vstv %s264
    %vm267 = vcmp.ge.s32.totalorder %v37, %v266
    %v268 = vstv %s265
    %vm269 = vcmp.lt.s32.totalorder %v37, %v268
    %vm270 = vmand %vm267, %vm269
    %vm271 = vmor %vm256, %vm270
    %s272 = scalar_lea.vmem [#allocation5], 96
    %v273 = vld [vmem:[%s272] sm:$0xff]
    %v274 = vld [vmem:[%s272 + $0x8] sm:$0xff]
    %v275 = vsel %vm271, 1, 0
    %vm276 = vcmp.eq.s32.totalorder %v275, 1
    %v277 = vsel %vm276, 0.0, %v273
    %v278 = vsel %vm276, 0.0, %v274
    %s279 = scalar_lea.vmem [#allocation8], 96
    %280 = vst.msk [vmem:[%s279] sm:$0xff] %vm69, %v277
    %281 = vst.msk [vmem:[%s279 + $0x8] sm:$0xff] %vm69, %v278
    %s282 = sadd.s32 %s38, 7
    %p283 = scmp.lt.s32.totalorder %s282, 7
    %s284 = scalar_select %p283, %s282, 7
    %s285 = sld [smem:[#allocation3 + %s284]]
    %s286 = sld [smem:[#allocation4 + %s284]]
    %v287 = vstv %s285
    %vm288 = vcmp.ge.s32.totalorder %v37, %v287
    %v289 = vstv %s286
    %vm290 = vcmp.lt.s32.totalorder %v37, %v289
    %vm291 = vmand %vm288, %vm290
    %s292 = sshra.s32 %s284, 7
    %s293 = sand.u32 %s284, 127
    %s294 = sadd.s32 %s292, 1
    %s295 = smul.u32 %s294, 128
    %s296 = sshra.s32 %s284, 7
    %s297 = sand.u32 %s284, 127
    %s298 = sadd.s32 %s295, %s297
    %s299 = sld [smem:[#allocation3 + %s298]]
    %s300 = sld [smem:[#allocation4 + %s298]]
    %v301 = vstv %s299
    %vm302 = vcmp.ge.s32.totalorder %v37, %v301
    %v303 = vstv %s300
    %vm304 = vcmp.lt.s32.totalorder %v37, %v303
    %vm305 = vmand %vm302, %vm304
    %vm306 = vmor %vm291, %vm305
    %s307 = scalar_lea.vmem [#allocation5], 112
    %v308 = vld [vmem:[%s307] sm:$0xff]
    %v309 = vld [vmem:[%s307 + $0x8] sm:$0xff]
    %v310 = vsel %vm306, 1, 0
    %vm311 = vcmp.eq.s32.totalorder %v310, 1
    %v312 = vsel %vm311, 0.0, %v308
    %v313 = vsel %vm311, 0.0, %v309
    %s314 = scalar_lea.vmem [#allocation8], 112
    %315 = vst.msk [vmem:[%s314] sm:$0xff] %vm69, %v312
    %316 = vst.msk [vmem:[%s314 + $0x8] sm:$0xff] %vm69, %v313
    // Predicated region
    $region10: #{tpu_custom_call.1} parent=1 // pred_check
      _
    $region11: #{tpu_custom_call.1} parent=1 // pred_check_branch
      %318 = sbr.rel (0) target = $region13
    $region12: #{tpu_custom_call.1} parent=1 // pred_region
      %s320 = ssub.s32 2048, 2048
      %321 = vsyncadd [#allocation7], %s320
      %s322 = sshll.u32 [#allocation8], 4
      %s323 = int_to_ptr.vmem [resolvable:$true] %s322
      %328 = dma.vmem_to_hbm [thread:$0]  %s323, 2048, %s3, [#allocation7], 128, 128, 8
    $region13: #{tpu_custom_call.1} parent=1 // pred_fallthru
      _
    // Predicated region
    $region14: #{tpu_custom_call.1} parent=1 // pred_check
      _
    $region15: #{tpu_custom_call.1} parent=1 // pred_check_branch
      %330 = sbr.rel (0) target = $region17
    $region16: #{tpu_custom_call.1} parent=1 // pred_region
      %331 = dma.done [#allocation7], 2048
    $region17: #{tpu_custom_call.1} parent=1 // pred_fallthru
      _
    %332 = vsyncpa [#allocation6], 1
    %333 = vsyncpa [#allocation7], 1

</llo_original>
